<compile_context>
chip_gen: v7x
topology: tpu7x:2x2x1
jax: 0.10.0
libtpu: 0.0.40
codegen_flags: <defaults>
</compile_context>

<pallas_src>
import math
import functools

import jax
import jax.numpy as jnp
from jax.experimental import pallas as pl
from jax.experimental.pallas import tpu as pltpu


def make_pe_buffer(d_model: int, max_len: int = 5000) -> jnp.ndarray:
    """Deterministic __init__-time buffer construction (plain JAX glue)."""
    position = jnp.arange(max_len, dtype=jnp.float32)[:, None]            # (max_len, 1)
    div_term = jnp.exp(
        jnp.arange(0, d_model, 2, dtype=jnp.float32)
        * (-math.log(10000.0) / d_model)
    )                                                                      # (d_model//2,)
    pe = jnp.zeros((max_len, d_model), dtype=jnp.float32)
    pe = pe.at[:, 0::2].set(jnp.sin(position * div_term))
    pe = pe.at[:, 1::2].set(jnp.cos(position * div_term))
    return pe


def _pe_add_kernel(x_ref, pe_ref, o_ref):
    # x_ref / o_ref: (TS, TL) tile of the flattened (S, B*D) view.
    # pe_ref:        (1, TL) invariant row; jnp broadcasting spreads it over
    #                the TS sublanes (pure VPU add, no explicit broadcast
    #                materialization).
    o_ref[...] = x_ref[...] + pe_ref[...]


def _pick_tiles(seq_len: int, lane_extent: int, itemsize: int,
                target_block_bytes: int = 4 * 1024 * 1024):
    """Pick (row_tile, lane_tile), preferring contiguous full-row blocks.

    Full-row tiles (tl == lane_extent) make each block DMA one contiguous
    HBM transfer.  Only when a single sublane-minimum-tall full-row block
    would blow past ~2x the target do we split the lane axis (128-multiple).
    Row tile is a multiple of the dtype's sublane pack or the full extent.
    """
    sublane_min = {4: 8, 2: 16, 1: 32}.get(itemsize, 8)
    row_bytes = lane_extent * itemsize

    if sublane_min * row_bytes <= 2 * target_block_bytes:
        tl = lane_extent                                   # contiguous full rows
    else:
        tl = max(128, min(lane_extent,
                          (target_block_bytes // (sublane_min * itemsize))
                          // 128 * 128))

    rows = max(sublane_min, target_block_bytes // (tl * itemsize))
    if rows >= seq_len:
        ts = seq_len
    else:
        ts = max(sublane_min, (rows // sublane_min) * sublane_min)
    return ts, tl


@functools.partial(jax.jit, static_argnames=("in_place", "force_kernel"))
def positional_encoding_forward(x: jnp.ndarray, pe: jnp.ndarray,
                                *, in_place: bool = False,
                                force_kernel: bool = False) -> jnp.ndarray:
    S, B, D = x.shape
    if B != S:
        # torch right-aligned broadcasting of pe[:S] (S, D) against (S, B, D)
        # requires B == S; that is the module's effective shape contract.
        raise ValueError("x + pe[:S] with a (max_len, d_model) pe buffer "
                         "requires batch == seq_len")
    BD = B * D

    # Match torch type promotion (bf16 x + f32 pe -> f32 result).
    out_dtype = jnp.result_type(x.dtype, pe.dtype)
    itemsize = jnp.dtype(out_dtype).itemsize

    # Small-tensor fast path: XLA's fused broadcast-add is already at
    # roofline; the Pallas path only adds fixed per-call/per-step overhead.
    if not force_kernel and S * BD * itemsize < (1 << 20):
        return x.astype(out_dtype) + pe[:S].astype(out_dtype)

    x2d = x.astype(out_dtype).reshape(S, BD)
    pe2d = pe[:S].astype(out_dtype).reshape(1, BD)   # == self.pe[:x.size(0)], flattened

    ts, tl = _pick_tiles(S, BD, itemsize)
    # Lane-block axis OUTER (slow), seq-block axis INNER (fast): the pe tile's
    # block index is constant across the inner axis, so it stays resident.
    grid = (pl.cdiv(BD, tl), pl.cdiv(S, ts))

    cost = pl.CostEstimate(
        flops=S * BD,
        bytes_accessed=2 * S * BD * itemsize + BD * itemsize,
        transcendentals=0,
    )

    out2d = pl.pallas_call(
        _pe_add_kernel,
        out_shape=jax.ShapeDtypeStruct((S, BD), out_dtype),
        grid=grid,
        in_specs=[
            pl.BlockSpec((ts, tl), lambda l, s: (s, l)),   # x tile
            pl.BlockSpec((1, tl), lambda l, s: (0, l)),    # invariant pe row
        ],
        out_specs=pl.BlockSpec((ts, tl), lambda l, s: (s, l)),
        compiler_params=pltpu.CompilerParams(
            dimension_semantics=("parallel", "parallel"),
            vmem_limit_bytes=48 * 1024 * 1024,   # explicit: safe on v5e/v6e/v7x
        ),
        cost_estimate=cost,
        input_output_aliases=({0: 0} if in_place else {}),
    )(x2d, pe2d)

    return out2d.reshape(S, B, D)


if __name__ == "__main__":
    # Small shapes consistent with the forward contract (S == B so the
    # module's literal broadcast is well-defined).
    seq_len, batch, d_model, max_len = 8, 8, 32, 64

    key = jax.random.PRNGKey(0)
    x = jax.random.normal(key, (seq_len, batch, d_model), dtype=jnp.float32)

    pe = make_pe_buffer(d_model, max_len)

    # force_kernel=True so the demo exercises the Pallas path even though the
    # tensor is tiny (production callers get the XLA fast path automatically).
    out = positional_encoding_forward(x, pe, force_kernel=True)
    out = jax.block_until_ready(out)

    # Pure-JAX reference of the exact torch expression: x + pe[:S]
    ref = x + pe[:seq_len]
    assert out.shape == (seq_len, batch, d_model)
    assert out.dtype == ref.dtype
    assert jnp.allclose(out, ref, atol=1e-6, rtol=1e-6)

    print("KERNEL_OK")
</pallas_src>

<mosaic_0001>
module attributes {stable_mosaic.version = 11 : i64} {
  func.func @_pe_add_kernel(%arg0: i32, %arg1: i32, %arg2: memref<8x256xf32, #tpu.memory_space<vmem>>, %arg3: memref<1x256xf32, #tpu.memory_space<vmem>>, %arg4: memref<8x256xf32, #tpu.memory_space<vmem>>) attributes {dimension_semantics = [#tpu.dimension_semantics<parallel>, #tpu.dimension_semantics<parallel>], iteration_bounds = array<i64: 1, 1>, scalar_prefetch = 0 : i64, scratch_operands = 0 : i64, tpu.core_type = #tpu.core_type<tc>, window_params = [{transform_indices = @transform_0, window_bounds = array<i64: 8, 256>}, {transform_indices = @transform_1, window_bounds = array<i64: 1, 256>}, {transform_indices = @transform_2, window_bounds = array<i64: 8, 256>}]} {
    %c0 = arith.constant 0 : index
    %c0_0 = arith.constant 0 : index
    %0 = vector.load %arg2[%c0, %c0_0] : memref<8x256xf32, #tpu.memory_space<vmem>>, vector<8x256xf32>
    %c0_1 = arith.constant 0 : index
    %c0_2 = arith.constant 0 : index
    %1 = vector.load %arg3[%c0_1, %c0_2] : memref<1x256xf32, #tpu.memory_space<vmem>>, vector<1x256xf32>
    %2 = vector.broadcast %1 : vector<1x256xf32> to vector<8x256xf32>
    %3 = arith.addf %0, %2 : vector<8x256xf32>
    %c0_3 = arith.constant 0 : index
    %c0_4 = arith.constant 0 : index
    %4 = vector.load %arg4[%c0_3, %c0_4] : memref<8x256xf32, #tpu.memory_space<vmem>>, vector<8x256xf32>
    tpu.vector_store %arg4[%c0_3, %c0_4], %3 {strides = array<i32>} : memref<8x256xf32, #tpu.memory_space<vmem>>, vector<8x256xf32>,
    return
  }
  func.func @transform_0(%arg0: i32, %arg1: i32) -> (i32, i32) {
    %c0_i32 = arith.constant 0 : i32
    return %arg1, %arg0 : i32, i32
  }
  func.func @transform_1(%arg0: i32, %arg1: i32) -> (i32, i32) {
    %c0_i32 = arith.constant 0 : i32
    %c0_i32_0 = arith.constant 0 : i32
    return %c0_i32, %arg0 : i32, i32
  }
  func.func @transform_2(%arg0: i32, %arg1: i32) -> (i32, i32) {
    %c0_i32 = arith.constant 0 : i32
    return %arg1, %arg0 : i32, i32
  }
}

</mosaic_0001>

<llo_original>
// kernel: positional_encoding_forward.1
$region0: #{positional_encoding_forward.1}
  #allocation0 [shape = 'u32[]', space=smem, size = 0x4, offset = 0x4, fixed_abs, tag = 'smem constant byte address 0x4 - core index']
  #allocation1 [shape = 'u32[144,128]{1,0:T(1,128)}', space=vmem, size = 0x12000, scoped, tag = 'internal scratch']
  %s0 = inlined_call_operand.vmem [shape: f32[8,256], index: 0, kind: input, shape index: {}]
  %s1 = inlined_call_operand.vmem [shape: f32[1,256], index: 1, kind: input, shape index: {}]
  %s2 = inlined_call_operand.vmem [shape: f32[8,256], index: 2, kind: output, shape index: {}]
  %s3 = sld [smem:[#allocation0]]
  $region18: #{positional_encoding_forward.1} parent=0
    _
  %s5 = ssub.s32 1, %s3
  %s6 = scalar_select 0, %s5, %s3
  // Predicated region
  $region2: #{positional_encoding_forward.1} parent=0 // pred_check
    _
  $region3: #{positional_encoding_forward.1} parent=0 // pred_check_branch
    %8 = sbr.rel (0) target = $region5
  $region4: #{positional_encoding_forward.1} parent=0 // pred_region
    _
  $region5: #{positional_encoding_forward.1} parent=0 // pred_fallthru
    _
  // Predicated region
  $region6: #{positional_encoding_forward.1} parent=0 // pred_check
    _
  $region7: #{positional_encoding_forward.1} parent=0 // pred_check_branch
    %10 = sbr.rel (0) target = $region9
  $region8: #{positional_encoding_forward.1} parent=0 // pred_region
    _
  $region9: #{positional_encoding_forward.1} parent=0 // pred_fallthru
    _
  %v11 = vld [vmem:[%s0] sm:$0xff]
  %v12 = vld [vmem:[%s0 + $0x8] sm:$0xff]
  %v13 = vld [vmem:[%s1] sm:$0x3]
  %v15 = vlaneseq
  %v16 = vshrl.u32 %v15, 7
  %v17 = vsub.s32 0, %v16
  %v18 = vrot.slane %v13, %v17
  %v19 = vlaneseq
  %v20 = vshrl.u32 %v19, 7
  %v21 = vsub.s32 1, %v20
  %v22 = vrot.slane %v13, %v21
  %v25 = vadd.f32 %v11, %v18
  %v26 = vadd.f32 %v12, %v22
  %27 = vst [vmem:[%s2] sm:$0xff] %v25
  %28 = vst [vmem:[%s2 + $0x8] sm:$0xff] %v26
  // Predicated region
  $region10: #{positional_encoding_forward.1} parent=0 // pred_check
    _
  $region11: #{positional_encoding_forward.1} parent=0 // pred_check_branch
    %30 = sbr.rel (0) target = $region13
  $region12: #{positional_encoding_forward.1} parent=0 // pred_region
    _
  $region13: #{positional_encoding_forward.1} parent=0 // pred_fallthru
    _
  // Predicated region
  $region14: #{positional_encoding_forward.1} parent=0 // pred_check
    _
  $region15: #{positional_encoding_forward.1} parent=0 // pred_check_branch
    %32 = sbr.rel (0) target = $region17
  $region16: #{positional_encoding_forward.1} parent=0 // pred_region
    _
  $region17: #{positional_encoding_forward.1} parent=0 // pred_fallthru
    _

</llo_original>
